<compile_context>
chip_gen: v5e
topology: v5e:2x2
jax: 0.10.0
libtpu: 0.0.40
codegen_flags: <defaults>
</compile_context>

<pallas_src>
import jax
import jax.numpy as jnp
from jax.experimental import pallas as pl
from jax.experimental.pallas import tpu as pltpu


# ---------------------------------------------------------------------------
# Kernel
# ---------------------------------------------------------------------------
def _add_one_kernel(x_ref, o_ref):
    # Elementwise hot path on the VPU over one VMEM tile.
    o_ref[...] = x_ref[...] + jnp.asarray(1, dtype=x_ref.dtype)


# ---------------------------------------------------------------------------
# Tuning constants / chip detection
# ---------------------------------------------------------------------------
_LANE_COLS = 1024                 # 8 * 128 -> full, unmasked vregs (pad path)
_MIN_DIRECT_LANES = 512           # trailing dim >= this -> direct (no-pad) path
_TINY_ELEMS = 128 * 1024          # below this, plain JAX wins (launch overhead)
_SPLIT_BYTES = 2 * 1024 * 1024    # above this, force >=2 grid steps (dual TC)


def _chip_config():
    """Returns (target_tile_bytes, vmem_limit_bytes_or_None) per TPU generation."""
    try:
        kind = jax.devices()[0].device_kind.lower()
    except Exception:  # pragma: no cover - defensive
        kind = ""
    if "v5e" in kind or "v5 lite" in kind or "v5litepod" in kind:
        return 2 * 1024 * 1024, None          # v5e: ~0.8 TB/s, 16 MiB scoped VMEM
    if "v7" in kind:
        return 8 * 1024 * 1024, 40 * 1024 * 1024  # v7x: 3.2 TB/s, raise scoped limit
    if "v6" in kind:
        return 4 * 1024 * 1024, None          # v6e: ~1.4 TB/s, fits 32 MiB default
    return 4 * 1024 * 1024, None              # other/unknown: conservative default


# ---------------------------------------------------------------------------
# Wrapper
# ---------------------------------------------------------------------------
def tudui_forward(x, donate=False):
    """Pallas equivalent of Tudui.forward: returns x + 1 (same shape/dtype,
    except bool which promotes like x + 1 in both frameworks)."""
    x = jnp.asarray(x)
    orig_shape = x.shape

    # Tiny / scalar / bool inputs: plain JAX (fused, roofline, no launch cost).
    if x.size < _TINY_ELEMS or x.dtype == jnp.bool_:
        return x + 1

    itemsize = jnp.dtype(x.dtype).itemsize

    # ---- Choose the 2-D slab presented to the kernel -----------------------
    if x.ndim >= 2 and orig_shape[-1] >= _MIN_DIRECT_LANES:
        # Direct path: collapse leading dims (free reshape), keep trailing dim
        # at full extent.  No pad / slice HBM round-trips; the last lane group
        # may be a masked store, which is cheap.
        cols = orig_shape[-1]
        rows = x.size // cols
        x2d = x.reshape(rows, cols)
        padded = 0
    else:
        # Ragged / 1-D / tiny-trailing-dim path: lane-dense (rows, 1024) slab.
        flat = x.reshape(-1)
        n = flat.size
        cols = _LANE_COLS
        rows = pl.cdiv(n, cols)
        total = rows * cols
        padded = total - n
        if padded:
            flat = jnp.pad(flat, (0, padded))
        x2d = flat.reshape(rows, cols)

    # ---- Generation-aware row tiling ---------------------------------------
    tile_bytes, vmem_limit = _chip_config()
    row_bytes = cols * itemsize
    tm = max(8, (tile_bytes // row_bytes) // 8 * 8)
    if tm >= rows:
        tm = rows
        # Guarantee >=2 grid steps for mid-sized inputs so both TensorCores on
        # v7x can drive DMA (harmless ~0.35us extra on single-TC chips).
        if rows >= 16 and rows * row_bytes >= _SPLIT_BYTES:
            tm = ((rows + 1) // 2 + 7) // 8 * 8
    grid = (pl.cdiv(rows, tm),)

    out2d = pl.pallas_call(
        _add_one_kernel,
        out_shape=jax.ShapeDtypeStruct((rows, cols), x.dtype),
        grid=grid,
        in_specs=[pl.BlockSpec((tm, cols), lambda i: (i, 0))],
        out_specs=pl.BlockSpec((tm, cols), lambda i: (i, 0)),
        compiler_params=pltpu.CompilerParams(
            dimension_semantics=("parallel",),
            vmem_limit_bytes=vmem_limit),
        cost_estimate=pl.CostEstimate(
            flops=rows * cols,
            transcendentals=0,
            bytes_accessed=2 * rows * cols * itemsize),
        input_output_aliases=({0: 0} if donate else {}),
    )(x2d)

    if padded:
        return out2d.reshape(-1)[: x.size].reshape(orig_shape)
    return out2d.reshape(orig_shape)


# ---------------------------------------------------------------------------
# Demo / self-test
# ---------------------------------------------------------------------------
if __name__ == "__main__":
    key = jax.random.PRNGKey(0)
    k1, k2, k3 = jax.random.split(key, 3)

    # Exact analogue of the reference script: x = torch.tensor(1.0)
    # (0-d scalar -> plain-JAX fast path).
    x_scalar = jnp.asarray(1.0, dtype=jnp.float32)
    out_scalar = jax.block_until_ready(tudui_forward(x_scalar))
    assert out_scalar.shape == ()
    assert jnp.allclose(out_scalar, 2.0)

    # Small 4-D tensor (2048 elems): below the launch-overhead threshold,
    # takes the plain-JAX path; correctness check only.
    x_small = jax.random.normal(k1, (2, 4, 16, 16), dtype=jnp.float32)
    out_small = jax.block_until_ready(tudui_forward(x_small))
    assert out_small.shape == x_small.shape
    assert jnp.allclose(out_small, x_small + 1.0)

    # Direct (no-pad) Pallas path: ndim>=2, trailing dim >= 512 but not a
    # multiple of 128 -> full-extent lane dim with a masked last lane store.
    x_direct = jax.random.normal(k2, (512, 520), dtype=jnp.float32)
    out_direct = jax.block_until_ready(tudui_forward(x_direct))
    assert out_direct.shape == x_direct.shape
    assert jnp.allclose(out_direct, x_direct + 1.0)

    # Ragged 1-D input: exercises the flatten-to-(rows,1024) pad path.
    x_ragged = jax.random.normal(k3, (300_000,), dtype=jnp.float32)
    out_ragged = jax.block_until_ready(tudui_forward(x_ragged))
    assert out_ragged.shape == x_ragged.shape
    assert jnp.allclose(out_ragged, x_ragged + 1.0)

    print("KERNEL_OK")
</pallas_src>

<mosaic_0001>
module attributes {stable_mosaic.version = 11 : i64} {
  func.func @_add_one_kernel(%arg0: i32, %arg1: memref<512x520xf32, #tpu.memory_space<vmem>>, %arg2: memref<512x520xf32, #tpu.memory_space<vmem>>) attributes {dimension_semantics = [#tpu.dimension_semantics<parallel>], iteration_bounds = array<i64: 1>, scalar_prefetch = 0 : i64, scratch_operands = 0 : i64, tpu.core_type = #tpu.core_type<tc>, window_params = [{transform_indices = @transform_0, window_bounds = array<i64: 512, 520>}, {transform_indices = @transform_1, window_bounds = array<i64: 512, 520>}]} {
    %c0 = arith.constant 0 : index
    %c0_0 = arith.constant 0 : index
    %0 = vector.load %arg1[%c0, %c0_0] : memref<512x520xf32, #tpu.memory_space<vmem>>, vector<512x520xf32>
    %cst = arith.constant 1.000000e+00 : f32
    %1 = vector.broadcast %cst : f32 to vector<512x520xf32>
    %2 = arith.addf %0, %1 : vector<512x520xf32>
    %c0_1 = arith.constant 0 : index
    %c0_2 = arith.constant 0 : index
    %3 = vector.load %arg2[%c0_1, %c0_2] : memref<512x520xf32, #tpu.memory_space<vmem>>, vector<512x520xf32>
    tpu.vector_store %arg2[%c0_1, %c0_2], %2 {strides = array<i32>} : memref<512x520xf32, #tpu.memory_space<vmem>>, vector<512x520xf32>,
    return
  }
  func.func @transform_0(%arg0: i32) -> (i32, i32) {
    %c0_i32 = arith.constant 0 : i32
    %c0_i32_0 = arith.constant 0 : i32
    return %arg0, %c0_i32 : i32, i32
  }
  func.func @transform_1(%arg0: i32) -> (i32, i32) {
    %c0_i32 = arith.constant 0 : i32
    %c0_i32_0 = arith.constant 0 : i32
    return %arg0, %c0_i32 : i32, i32
  }
}

</mosaic_0001>

<llo_original>
// kernel: tpu_custom_call.1
$region0: #{tpu_custom_call.1}
  #allocation0 [shape = 'u32[]', space=smem, size = 0x4, offset = 0x4, fixed_abs, tag = 'smem constant byte address 0x4 - core index']
  #allocation1 [shape = 'u32[72,128]{1,0:T(1,128)}', space=vmem, size = 0x9000, scoped, tag = 'internal scratch']
  %s0 = inlined_call_operand.vmem [shape: f32[512,520], index: 0, kind: input, shape index: {}]
  %s1 = inlined_call_operand.vmem [shape: f32[512,520], index: 1, kind: output, shape index: {}]
  %s2 = sld [smem:[#allocation0]]
  $region14: #{tpu_custom_call.1} parent=0
    _
  %s4 = ssub.s32 1, %s2
  %s5 = scalar_select 0, %s4, %s2
  // Predicated region
  $region2: #{tpu_custom_call.1} parent=0 // pred_check
    _
  $region3: #{tpu_custom_call.1} parent=0 // pred_check_branch
    %7 = sbr.rel (0) target = $region5
  $region4: #{tpu_custom_call.1} parent=0 // pred_region
    _
  $region5: #{tpu_custom_call.1} parent=0 // pred_fallthru
    _
  %v8 = vld [vmem:[%s0] sm:$0xff]
  %v9 = vld [vmem:[%s0 + $0x8] sm:$0xff]
  %v10 = vld [vmem:[%s0 + $0x10] sm:$0xff]
  %v11 = vld [vmem:[%s0 + $0x18] sm:$0xff]
  %v12 = vld [vmem:[%s0 + $0x20] sm:$0xff]
  %v13 = vld [vmem:[%s0 + $0x28] sm:$0xff]
  %v14 = vld [vmem:[%s0 + $0x30] sm:$0xff]
  %v15 = vld [vmem:[%s0 + $0x38] sm:$0xff]
  %v16 = vld [vmem:[%s0 + $0x40] sm:$0xff]
  %v17 = vld [vmem:[%s0 + $0x48] sm:$0xff]
  %v18 = vld [vmem:[%s0 + $0x50] sm:$0xff]
  %v19 = vld [vmem:[%s0 + $0x58] sm:$0xff]
  %v20 = vld [vmem:[%s0 + $0x60] sm:$0xff]
  %v21 = vld [vmem:[%s0 + $0x68] sm:$0xff]
  %v22 = vld [vmem:[%s0 + $0x70] sm:$0xff]
  %v23 = vld [vmem:[%s0 + $0x78] sm:$0xff]
  %v24 = vld [vmem:[%s0 + $0x80] sm:$0xff]
  %v25 = vld [vmem:[%s0 + $0x88] sm:$0xff]
  %v26 = vld [vmem:[%s0 + $0x90] sm:$0xff]
  %v27 = vld [vmem:[%s0 + $0x98] sm:$0xff]
  %v28 = vld [vmem:[%s0 + $0xa0] sm:$0xff]
  %v29 = vld [vmem:[%s0 + $0xa8] sm:$0xff]
  %v30 = vld [vmem:[%s0 + $0xb0] sm:$0xff]
  %v31 = vld [vmem:[%s0 + $0xb8] sm:$0xff]
  %v32 = vld [vmem:[%s0 + $0xc0] sm:$0xff]
  %v33 = vld [vmem:[%s0 + $0xc8] sm:$0xff]
  %v34 = vld [vmem:[%s0 + $0xd0] sm:$0xff]
  %v35 = vld [vmem:[%s0 + $0xd8] sm:$0xff]
  %v36 = vld [vmem:[%s0 + $0xe0] sm:$0xff]
  %v37 = vld [vmem:[%s0 + $0xe8] sm:$0xff]
  %v38 = vld [vmem:[%s0 + $0xf0] sm:$0xff]
  %v39 = vld [vmem:[%s0 + $0xf8] sm:$0xff]
  %v40 = vld [vmem:[%s0 + $0x100] sm:$0xff]
  %v41 = vld [vmem:[%s0 + $0x108] sm:$0xff]
  %v42 = vld [vmem:[%s0 + $0x110] sm:$0xff]
  %v43 = vld [vmem:[%s0 + $0x118] sm:$0xff]
  %v44 = vld [vmem:[%s0 + $0x120] sm:$0xff]
  %v45 = vld [vmem:[%s0 + $0x128] sm:$0xff]
  %v46 = vld [vmem:[%s0 + $0x130] sm:$0xff]
  %v47 = vld [vmem:[%s0 + $0x138] sm:$0xff]
  %v48 = vld [vmem:[%s0 + $0x140] sm:$0xff]
  %v49 = vld [vmem:[%s0 + $0x148] sm:$0xff]
  %v50 = vld [vmem:[%s0 + $0x150] sm:$0xff]
  %v51 = vld [vmem:[%s0 + $0x158] sm:$0xff]
  %v52 = vld [vmem:[%s0 + $0x160] sm:$0xff]
  %v53 = vld [vmem:[%s0 + $0x168] sm:$0xff]
  %v54 = vld [vmem:[%s0 + $0x170] sm:$0xff]
  %v55 = vld [vmem:[%s0 + $0x178] sm:$0xff]
  %v56 = vld [vmem:[%s0 + $0x180] sm:$0xff]
  %v57 = vld [vmem:[%s0 + $0x188] sm:$0xff]
  %v58 = vld [vmem:[%s0 + $0x190] sm:$0xff]
  %v59 = vld [vmem:[%s0 + $0x198] sm:$0xff]
  %v60 = vld [vmem:[%s0 + $0x1a0] sm:$0xff]
  %v61 = vld [vmem:[%s0 + $0x1a8] sm:$0xff]
  %v62 = vld [vmem:[%s0 + $0x1b0] sm:$0xff]
  %v63 = vld [vmem:[%s0 + $0x1b8] sm:$0xff]
  %v64 = vld [vmem:[%s0 + $0x1c0] sm:$0xff]
  %v65 = vld [vmem:[%s0 + $0x1c8] sm:$0xff]
  %v66 = vld [vmem:[%s0 + $0x1d0] sm:$0xff]
  %v67 = vld [vmem:[%s0 + $0x1d8] sm:$0xff]
  %v68 = vld [vmem:[%s0 + $0x1e0] sm:$0xff]
  %v69 = vld [vmem:[%s0 + $0x1e8] sm:$0xff]
  %v70 = vld [vmem:[%s0 + $0x1f0] sm:$0xff]
  %v71 = vld [vmem:[%s0 + $0x1f8] sm:$0xff]
  %v72 = vld [vmem:[%s0 + $0x200] sm:$0xff]
  %v73 = vld [vmem:[%s0 + $0x208] sm:$0xff]
  %v74 = vld [vmem:[%s0 + $0x210] sm:$0xff]
  %v75 = vld [vmem:[%s0 + $0x218] sm:$0xff]
  %v76 = vld [vmem:[%s0 + $0x220] sm:$0xff]
  %v77 = vld [vmem:[%s0 + $0x228] sm:$0xff]
  %v78 = vld [vmem:[%s0 + $0x230] sm:$0xff]
  %v79 = vld [vmem:[%s0 + $0x238] sm:$0xff]
  %v80 = vld [vmem:[%s0 + $0x240] sm:$0xff]
  %v81 = vld [vmem:[%s0 + $0x248] sm:$0xff]
  %v82 = vld [vmem:[%s0 + $0x250] sm:$0xff]
  %v83 = vld [vmem:[%s0 + $0x258] sm:$0xff]
  %v84 = vld [vmem:[%s0 + $0x260] sm:$0xff]
  %v85 = vld [vmem:[%s0 + $0x268] sm:$0xff]
  %v86 = vld [vmem:[%s0 + $0x270] sm:$0xff]
  %v87 = vld [vmem:[%s0 + $0x278] sm:$0xff]
  %v88 = vld [vmem:[%s0 + $0x280] sm:$0xff]
  %v89 = vld [vmem:[%s0 + $0x288] sm:$0xff]
  %v90 = vld [vmem:[%s0 + $0x290] sm:$0xff]
  %v91 = vld [vmem:[%s0 + $0x298] sm:$0xff]
  %v92 = vld [vmem:[%s0 + $0x2a0] sm:$0xff]
  %v93 = vld [vmem:[%s0 + $0x2a8] sm:$0xff]
  %v94 = vld [vmem:[%s0 + $0x2b0] sm:$0xff]
  %v95 = vld [vmem:[%s0 + $0x2b8] sm:$0xff]
  %v96 = vld [vmem:[%s0 + $0x2c0] sm:$0xff]
  %v97 = vld [vmem:[%s0 + $0x2c8] sm:$0xff]
  %v98 = vld [vmem:[%s0 + $0x2d0] sm:$0xff]
  %v99 = vld [vmem:[%s0 + $0x2d8] sm:$0xff]
  %v100 = vld [vmem:[%s0 + $0x2e0] sm:$0xff]
  %v101 = vld [vmem:[%s0 + $0x2e8] sm:$0xff]
  %v102 = vld [vmem:[%s0 + $0x2f0] sm:$0xff]
  %v103 = vld [vmem:[%s0 + $0x2f8] sm:$0xff]
  %v104 = vld [vmem:[%s0 + $0x300] sm:$0xff]
  %v105 = vld [vmem:[%s0 + $0x308] sm:$0xff]
  %v106 = vld [vmem:[%s0 + $0x310] sm:$0xff]
  %v107 = vld [vmem:[%s0 + $0x318] sm:$0xff]
  %v108 = vld [vmem:[%s0 + $0x320] sm:$0xff]
  %v109 = vld [vmem:[%s0 + $0x328] sm:$0xff]
  %v110 = vld [vmem:[%s0 + $0x330] sm:$0xff]
  %v111 = vld [vmem:[%s0 + $0x338] sm:$0xff]
  %v112 = vld [vmem:[%s0 + $0x340] sm:$0xff]
  %v113 = vld [vmem:[%s0 + $0x348] sm:$0xff]
  %v114 = vld [vmem:[%s0 + $0x350] sm:$0xff]
  %v115 = vld [vmem:[%s0 + $0x358] sm:$0xff]
  %v116 = vld [vmem:[%s0 + $0x360] sm:$0xff]
  %v117 = vld [vmem:[%s0 + $0x368] sm:$0xff]
  %v118 = vld [vmem:[%s0 + $0x370] sm:$0xff]
  %v119 = vld [vmem:[%s0 + $0x378] sm:$0xff]
  %v120 = vld [vmem:[%s0 + $0x380] sm:$0xff]
  %v121 = vld [vmem:[%s0 + $0x388] sm:$0xff]
  %v122 = vld [vmem:[%s0 + $0x390] sm:$0xff]
  %v123 = vld [vmem:[%s0 + $0x398] sm:$0xff]
  %v124 = vld [vmem:[%s0 + $0x3a0] sm:$0xff]
  %v125 = vld [vmem:[%s0 + $0x3a8] sm:$0xff]
  %v126 = vld [vmem:[%s0 + $0x3b0] sm:$0xff]
  %v127 = vld [vmem:[%s0 + $0x3b8] sm:$0xff]
  %v128 = vld [vmem:[%s0 + $0x3c0] sm:$0xff]
  %v129 = vld [vmem:[%s0 + $0x3c8] sm:$0xff]
  %v130 = vld [vmem:[%s0 + $0x3d0] sm:$0xff]
  %v131 = vld [vmem:[%s0 + $0x3d8] sm:$0xff]
  %v132 = vld [vmem:[%s0 + $0x3e0] sm:$0xff]
  %v133 = vld [vmem:[%s0 + $0x3e8] sm:$0xff]
  %v134 = vld [vmem:[%s0 + $0x3f0] sm:$0xff]
  %v135 = vld [vmem:[%s0 + $0x3f8] sm:$0xff]
  %v136 = vld [vmem:[%s0 + $0x400] sm:$0xff]
  %v137 = vld [vmem:[%s0 + $0x408] sm:$0xff]
  %v138 = vld [vmem:[%s0 + $0x410] sm:$0xff]
  %v139 = vld [vmem:[%s0 + $0x418] sm:$0xff]
  %v140 = vld [vmem:[%s0 + $0x420] sm:$0xff]
  %v141 = vld [vmem:[%s0 + $0x428] sm:$0xff]
  %v142 = vld [vmem:[%s0 + $0x430] sm:$0xff]
  %v143 = vld [vmem:[%s0 + $0x438] sm:$0xff]
  %v144 = vld [vmem:[%s0 + $0x440] sm:$0xff]
  %v145 = vld [vmem:[%s0 + $0x448] sm:$0xff]
  %v146 = vld [vmem:[%s0 + $0x450] sm:$0xff]
  %v147 = vld [vmem:[%s0 + $0x458] sm:$0xff]
  %v148 = vld [vmem:[%s0 + $0x460] sm:$0xff]
  %v149 = vld [vmem:[%s0 + $0x468] sm:$0xff]
  %v150 = vld [vmem:[%s0 + $0x470] sm:$0xff]
  %v151 = vld [vmem:[%s0 + $0x478] sm:$0xff]
  %v152 = vld [vmem:[%s0 + $0x480] sm:$0xff]
  %v153 = vld [vmem:[%s0 + $0x488] sm:$0xff]
  %v154 = vld [vmem:[%s0 + $0x490] sm:$0xff]
  %v155 = vld [vmem:[%s0 + $0x498] sm:$0xff]
  %v156 = vld [vmem:[%s0 + $0x4a0] sm:$0xff]
  %v157 = vld [vmem:[%s0 + $0x4a8] sm:$0xff]
  %v158 = vld [vmem:[%s0 + $0x4b0] sm:$0xff]
  %v159 = vld [vmem:[%s0 + $0x4b8] sm:$0xff]
  %v160 = vld [vmem:[%s0 + $0x4c0] sm:$0xff]
  %v161 = vld [vmem:[%s0 + $0x4c8] sm:$0xff]
  %v162 = vld [vmem:[%s0 + $0x4d0] sm:$0xff]
  %v163 = vld [vmem:[%s0 + $0x4d8] sm:$0xff]
  %v164 = vld [vmem:[%s0 + $0x4e0] sm:$0xff]
  %v165 = vld [vmem:[%s0 + $0x4e8] sm:$0xff]
  %v166 = vld [vmem:[%s0 + $0x4f0] sm:$0xff]
  %v167 = vld [vmem:[%s0 + $0x4f8] sm:$0xff]
  %v168 = vld [vmem:[%s0 + $0x500] sm:$0xff]
  %v169 = vld [vmem:[%s0 + $0x508] sm:$0xff]
  %v170 = vld [vmem:[%s0 + $0x510] sm:$0xff]
  %v171 = vld [vmem:[%s0 + $0x518] sm:$0xff]
  %v172 = vld [vmem:[%s0 + $0x520] sm:$0xff]
  %v173 = vld [vmem:[%s0 + $0x528] sm:$0xff]
  %v174 = vld [vmem:[%s0 + $0x530] sm:$0xff]
  %v175 = vld [vmem:[%s0 + $0x538] sm:$0xff]
  %v176 = vld [vmem:[%s0 + $0x540] sm:$0xff]
  %v177 = vld [vmem:[%s0 + $0x548] sm:$0xff]
  %v178 = vld [vmem:[%s0 + $0x550] sm:$0xff]
  %v179 = vld [vmem:[%s0 + $0x558] sm:$0xff]
  %v180 = vld [vmem:[%s0 + $0x560] sm:$0xff]
  %v181 = vld [vmem:[%s0 + $0x568] sm:$0xff]
  %v182 = vld [vmem:[%s0 + $0x570] sm:$0xff]
  %v183 = vld [vmem:[%s0 + $0x578] sm:$0xff]
  %v184 = vld [vmem:[%s0 + $0x580] sm:$0xff]
  %v185 = vld [vmem:[%s0 + $0x588] sm:$0xff]
  %v186 = vld [vmem:[%s0 + $0x590] sm:$0xff]
  %v187 = vld [vmem:[%s0 + $0x598] sm:$0xff]
  %v188 = vld [vmem:[%s0 + $0x5a0] sm:$0xff]
  %v189 = vld [vmem:[%s0 + $0x5a8] sm:$0xff]
  %v190 = vld [vmem:[%s0 + $0x5b0] sm:$0xff]
  %v191 = vld [vmem:[%s0 + $0x5b8] sm:$0xff]
  %v192 = vld [vmem:[%s0 + $0x5c0] sm:$0xff]
  %v193 = vld [vmem:[%s0 + $0x5c8] sm:$0xff]
  %v194 = vld [vmem:[%s0 + $0x5d0] sm:$0xff]
  %v195 = vld [vmem:[%s0 + $0x5d8] sm:$0xff]
  %v196 = vld [vmem:[%s0 + $0x5e0] sm:$0xff]
  %v197 = vld [vmem:[%s0 + $0x5e8] sm:$0xff]
  %v198 = vld [vmem:[%s0 + $0x5f0] sm:$0xff]
  %v199 = vld [vmem:[%s0 + $0x5f8] sm:$0xff]
  %v200 = vld [vmem:[%s0 + $0x600] sm:$0xff]
  %v201 = vld [vmem:[%s0 + $0x608] sm:$0xff]
  %v202 = vld [vmem:[%s0 + $0x610] sm:$0xff]
  %v203 = vld [vmem:[%s0 + $0x618] sm:$0xff]
  %v204 = vld [vmem:[%s0 + $0x620] sm:$0xff]
  %v205 = vld [vmem:[%s0 + $0x628] sm:$0xff]
  %v206 = vld [vmem:[%s0 + $0x630] sm:$0xff]
  %v207 = vld [vmem:[%s0 + $0x638] sm:$0xff]
  %v208 = vld [vmem:[%s0 + $0x640] sm:$0xff]
  %v209 = vld [vmem:[%s0 + $0x648] sm:$0xff]
  %v210 = vld [vmem:[%s0 + $0x650] sm:$0xff]
  %v211 = vld [vmem:[%s0 + $0x658] sm:$0xff]
  %v212 = vld [vmem:[%s0 + $0x660] sm:$0xff]
  %v213 = vld [vmem:[%s0 + $0x668] sm:$0xff]
  %v214 = vld [vmem:[%s0 + $0x670] sm:$0xff]
  %v215 = vld [vmem:[%s0 + $0x678] sm:$0xff]
  %v216 = vld [vmem:[%s0 + $0x680] sm:$0xff]
  %v217 = vld [vmem:[%s0 + $0x688] sm:$0xff]
  %v218 = vld [vmem:[%s0 + $0x690] sm:$0xff]
  %v219 = vld [vmem:[%s0 + $0x698] sm:$0xff]
  %v220 = vld [vmem:[%s0 + $0x6a0] sm:$0xff]
  %v221 = vld [vmem:[%s0 + $0x6a8] sm:$0xff]
  %v222 = vld [vmem:[%s0 + $0x6b0] sm:$0xff]
  %v223 = vld [vmem:[%s0 + $0x6b8] sm:$0xff]
  %v224 = vld [vmem:[%s0 + $0x6c0] sm:$0xff]
  %v225 = vld [vmem:[%s0 + $0x6c8] sm:$0xff]
  %v226 = vld [vmem:[%s0 + $0x6d0] sm:$0xff]
  %v227 = vld [vmem:[%s0 + $0x6d8] sm:$0xff]
  %v228 = vld [vmem:[%s0 + $0x6e0] sm:$0xff]
  %v229 = vld [vmem:[%s0 + $0x6e8] sm:$0xff]
  %v230 = vld [vmem:[%s0 + $0x6f0] sm:$0xff]
  %v231 = vld [vmem:[%s0 + $0x6f8] sm:$0xff]
  %v232 = vld [vmem:[%s0 + $0x700] sm:$0xff]
  %v233 = vld [vmem:[%s0 + $0x708] sm:$0xff]
  %v234 = vld [vmem:[%s0 + $0x710] sm:$0xff]
  %v235 = vld [vmem:[%s0 + $0x718] sm:$0xff]
  %v236 = vld [vmem:[%s0 + $0x720] sm:$0xff]
  %v237 = vld [vmem:[%s0 + $0x728] sm:$0xff]
  %v238 = vld [vmem:[%s0 + $0x730] sm:$0xff]
  %v239 = vld [vmem:[%s0 + $0x738] sm:$0xff]
  %v240 = vld [vmem:[%s0 + $0x740] sm:$0xff]
  %v241 = vld [vmem:[%s0 + $0x748] sm:$0xff]
  %v242 = vld [vmem:[%s0 + $0x750] sm:$0xff]
  %v243 = vld [vmem:[%s0 + $0x758] sm:$0xff]
  %v244 = vld [vmem:[%s0 + $0x760] sm:$0xff]
  %v245 = vld [vmem:[%s0 + $0x768] sm:$0xff]
  %v246 = vld [vmem:[%s0 + $0x770] sm:$0xff]
  %v247 = vld [vmem:[%s0 + $0x778] sm:$0xff]
  %v248 = vld [vmem:[%s0 + $0x780] sm:$0xff]
  %v249 = vld [vmem:[%s0 + $0x788] sm:$0xff]
  %v250 = vld [vmem:[%s0 + $0x790] sm:$0xff]
  %v251 = vld [vmem:[%s0 + $0x798] sm:$0xff]
  %v252 = vld [vmem:[%s0 + $0x7a0] sm:$0xff]
  %v253 = vld [vmem:[%s0 + $0x7a8] sm:$0xff]
  %v254 = vld [vmem:[%s0 + $0x7b0] sm:$0xff]
  %v255 = vld [vmem:[%s0 + $0x7b8] sm:$0xff]
  %v256 = vld [vmem:[%s0 + $0x7c0] sm:$0xff]
  %v257 = vld [vmem:[%s0 + $0x7c8] sm:$0xff]
  %v258 = vld [vmem:[%s0 + $0x7d0] sm:$0xff]
  %v259 = vld [vmem:[%s0 + $0x7d8] sm:$0xff]
  %v260 = vld [vmem:[%s0 + $0x7e0] sm:$0xff]
  %v261 = vld [vmem:[%s0 + $0x7e8] sm:$0xff]
  %v262 = vld [vmem:[%s0 + $0x7f0] sm:$0xff]
  %v263 = vld [vmem:[%s0 + $0x7f8] sm:$0xff]
  %v264 = vld [vmem:[%s0 + $0x800] sm:$0xff]
  %v265 = vld [vmem:[%s0 + $0x808] sm:$0xff]
  %v266 = vld [vmem:[%s0 + $0x810] sm:$0xff]
  %v267 = vld [vmem:[%s0 + $0x818] sm:$0xff]
  %v268 = vld [vmem:[%s0 + $0x820] sm:$0xff]
  %v269 = vld [vmem:[%s0 + $0x828] sm:$0xff]
  %v270 = vld [vmem:[%s0 + $0x830] sm:$0xff]
  %v271 = vld [vmem:[%s0 + $0x838] sm:$0xff]
  %v272 = vld [vmem:[%s0 + $0x840] sm:$0xff]
  %v273 = vld [vmem:[%s0 + $0x848] sm:$0xff]
  %v274 = vld [vmem:[%s0 + $0x850] sm:$0xff]
  %v275 = vld [vmem:[%s0 + $0x858] sm:$0xff]
  %v276 = vld [vmem:[%s0 + $0x860] sm:$0xff]
  %v277 = vld [vmem:[%s0 + $0x868] sm:$0xff]
  %v278 = vld [vmem:[%s0 + $0x870] sm:$0xff]
  %v279 = vld [vmem:[%s0 + $0x878] sm:$0xff]
  %v280 = vld [vmem:[%s0 + $0x880] sm:$0xff]
  %v281 = vld [vmem:[%s0 + $0x888] sm:$0xff]
  %v282 = vld [vmem:[%s0 + $0x890] sm:$0xff]
  %v283 = vld [vmem:[%s0 + $0x898] sm:$0xff]
  %v284 = vld [vmem:[%s0 + $0x8a0] sm:$0xff]
  %v285 = vld [vmem:[%s0 + $0x8a8] sm:$0xff]
  %v286 = vld [vmem:[%s0 + $0x8b0] sm:$0xff]
  %v287 = vld [vmem:[%s0 + $0x8b8] sm:$0xff]
  %v288 = vld [vmem:[%s0 + $0x8c0] sm:$0xff]
  %v289 = vld [vmem:[%s0 + $0x8c8] sm:$0xff]
  %v290 = vld [vmem:[%s0 + $0x8d0] sm:$0xff]
  %v291 = vld [vmem:[%s0 + $0x8d8] sm:$0xff]
  %v292 = vld [vmem:[%s0 + $0x8e0] sm:$0xff]
  %v293 = vld [vmem:[%s0 + $0x8e8] sm:$0xff]
  %v294 = vld [vmem:[%s0 + $0x8f0] sm:$0xff]
  %v295 = vld [vmem:[%s0 + $0x8f8] sm:$0xff]
  %v296 = vld [vmem:[%s0 + $0x900] sm:$0xff]
  %v297 = vld [vmem:[%s0 + $0x908] sm:$0xff]
  %v298 = vld [vmem:[%s0 + $0x910] sm:$0xff]
  %v299 = vld [vmem:[%s0 + $0x918] sm:$0xff]
  %v300 = vld [vmem:[%s0 + $0x920] sm:$0xff]
  %v301 = vld [vmem:[%s0 + $0x928] sm:$0xff]
  %v302 = vld [vmem:[%s0 + $0x930] sm:$0xff]
  %v303 = vld [vmem:[%s0 + $0x938] sm:$0xff]
  %v304 = vld [vmem:[%s0 + $0x940] sm:$0xff]
  %v305 = vld [vmem:[%s0 + $0x948] sm:$0xff]
  %v306 = vld [vmem:[%s0 + $0x950] sm:$0xff]
  %v307 = vld [vmem:[%s0 + $0x958] sm:$0xff]
  %v308 = vld [vmem:[%s0 + $0x960] sm:$0xff]
  %v309 = vld [vmem:[%s0 + $0x968] sm:$0xff]
  %v310 = vld [vmem:[%s0 + $0x970] sm:$0xff]
  %v311 = vld [vmem:[%s0 + $0x978] sm:$0xff]
  %v312 = vld [vmem:[%s0 + $0x980] sm:$0xff]
  %v313 = vld [vmem:[%s0 + $0x988] sm:$0xff]
  %v314 = vld [vmem:[%s0 + $0x990] sm:$0xff]
  %v315 = vld [vmem:[%s0 + $0x998] sm:$0xff]
  %v316 = vld [vmem:[%s0 + $0x9a0] sm:$0xff]
  %v317 = vld [vmem:[%s0 + $0x9a8] sm:$0xff]
  %v318 = vld [vmem:[%s0 + $0x9b0] sm:$0xff]
  %v319 = vld [vmem:[%s0 + $0x9b8] sm:$0xff]
  %v320 = vld [vmem:[%s0 + $0x9c0] sm:$0xff]
  %v321 = vld [vmem:[%s0 + $0x9c8] sm:$0xff]
  %v322 = vld [vmem:[%s0 + $0x9d0] sm:$0xff]
  %v323 = vld [vmem:[%s0 + $0x9d8] sm:$0xff]
  %v324 = vld [vmem:[%s0 + $0x9e0] sm:$0xff]
  %v325 = vld [vmem:[%s0 + $0x9e8] sm:$0xff]
  %v326 = vld [vmem:[%s0 + $0x9f0] sm:$0xff]
  %v327 = vld [vmem:[%s0 + $0x9f8] sm:$0xff]
  %v328 = vadd.f32 %v8, 1.0
  %v329 = vadd.f32 %v9, 1.0
  %v330 = vadd.f32 %v10, 1.0
  %v331 = vadd.f32 %v11, 1.0
  %v332 = vadd.f32 %v12, 1.0
  %v333 = vadd.f32 %v13, 1.0
  %v334 = vadd.f32 %v14, 1.0
  %v335 = vadd.f32 %v15, 1.0
  %v336 = vadd.f32 %v16, 1.0
  %v337 = vadd.f32 %v17, 1.0
  %v338 = vadd.f32 %v18, 1.0
  %v339 = vadd.f32 %v19, 1.0
  %v340 = vadd.f32 %v20, 1.0
  %v341 = vadd.f32 %v21, 1.0
  %v342 = vadd.f32 %v22, 1.0
  %v343 = vadd.f32 %v23, 1.0
  %v344 = vadd.f32 %v24, 1.0
  %v345 = vadd.f32 %v25, 1.0
  %v346 = vadd.f32 %v26, 1.0
  %v347 = vadd.f32 %v27, 1.0
  %v348 = vadd.f32 %v28, 1.0
  %v349 = vadd.f32 %v29, 1.0
  %v350 = vadd.f32 %v30, 1.0
  %v351 = vadd.f32 %v31, 1.0
  %v352 = vadd.f32 %v32, 1.0
  %v353 = vadd.f32 %v33, 1.0
  %v354 = vadd.f32 %v34, 1.0
  %v355 = vadd.f32 %v35, 1.0
  %v356 = vadd.f32 %v36, 1.0
  %v357 = vadd.f32 %v37, 1.0
  %v358 = vadd.f32 %v38, 1.0
  %v359 = vadd.f32 %v39, 1.0
  %v360 = vadd.f32 %v40, 1.0
  %v361 = vadd.f32 %v41, 1.0
  %v362 = vadd.f32 %v42, 1.0
  %v363 = vadd.f32 %v43, 1.0
  %v364 = vadd.f32 %v44, 1.0
  %v365 = vadd.f32 %v45, 1.0
  %v366 = vadd.f32 %v46, 1.0
  %v367 = vadd.f32 %v47, 1.0
  %v368 = vadd.f32 %v48, 1.0
  %v369 = vadd.f32 %v49, 1.0
  %v370 = vadd.f32 %v50, 1.0
  %v371 = vadd.f32 %v51, 1.0
  %v372 = vadd.f32 %v52, 1.0
  %v373 = vadd.f32 %v53, 1.0
  %v374 = vadd.f32 %v54, 1.0
  %v375 = vadd.f32 %v55, 1.0
  %v376 = vadd.f32 %v56, 1.0
  %v377 = vadd.f32 %v57, 1.0
  %v378 = vadd.f32 %v58, 1.0
  %v379 = vadd.f32 %v59, 1.0
  %v380 = vadd.f32 %v60, 1.0
  %v381 = vadd.f32 %v61, 1.0
  %v382 = vadd.f32 %v62, 1.0
  %v383 = vadd.f32 %v63, 1.0
  %v384 = vadd.f32 %v64, 1.0
  %v385 = vadd.f32 %v65, 1.0
  %v386 = vadd.f32 %v66, 1.0
  %v387 = vadd.f32 %v67, 1.0
  %v388 = vadd.f32 %v68, 1.0
  %v389 = vadd.f32 %v69, 1.0
  %v390 = vadd.f32 %v70, 1.0
  %v391 = vadd.f32 %v71, 1.0
  %v392 = vadd.f32 %v72, 1.0
  %v393 = vadd.f32 %v73, 1.0
  %v394 = vadd.f32 %v74, 1.0
  %v395 = vadd.f32 %v75, 1.0
  %v396 = vadd.f32 %v76, 1.0
  %v397 = vadd.f32 %v77, 1.0
  %v398 = vadd.f32 %v78, 1.0
  %v399 = vadd.f32 %v79, 1.0
  %v400 = vadd.f32 %v80, 1.0
  %v401 = vadd.f32 %v81, 1.0
  %v402 = vadd.f32 %v82, 1.0
  %v403 = vadd.f32 %v83, 1.0
  %v404 = vadd.f32 %v84, 1.0
  %v405 = vadd.f32 %v85, 1.0
  %v406 = vadd.f32 %v86, 1.0
  %v407 = vadd.f32 %v87, 1.0
  %v408 = vadd.f32 %v88, 1.0
  %v409 = vadd.f32 %v89, 1.0
  %v410 = vadd.f32 %v90, 1.0
  %v411 = vadd.f32 %v91, 1.0
  %v412 = vadd.f32 %v92, 1.0
  %v413 = vadd.f32 %v93, 1.0
  %v414 = vadd.f32 %v94, 1.0
  %v415 = vadd.f32 %v95, 1.0
  %v416 = vadd.f32 %v96, 1.0
  %v417 = vadd.f32 %v97, 1.0
  %v418 = vadd.f32 %v98, 1.0
  %v419 = vadd.f32 %v99, 1.0
  %v420 = vadd.f32 %v100, 1.0
  %v421 = vadd.f32 %v101, 1.0
  %v422 = vadd.f32 %v102, 1.0
  %v423 = vadd.f32 %v103, 1.0
  %v424 = vadd.f32 %v104, 1.0
  %v425 = vadd.f32 %v105, 1.0
  %v426 = vadd.f32 %v106, 1.0
  %v427 = vadd.f32 %v107, 1.0
  %v428 = vadd.f32 %v108, 1.0
  %v429 = vadd.f32 %v109, 1.0
  %v430 = vadd.f32 %v110, 1.0
  %v431 = vadd.f32 %v111, 1.0
  %v432 = vadd.f32 %v112, 1.0
  %v433 = vadd.f32 %v113, 1.0
  %v434 = vadd.f32 %v114, 1.0
  %v435 = vadd.f32 %v115, 1.0
  %v436 = vadd.f32 %v116, 1.0
  %v437 = vadd.f32 %v117, 1.0
  %v438 = vadd.f32 %v118, 1.0
  %v439 = vadd.f32 %v119, 1.0
  %v440 = vadd.f32 %v120, 1.0
  %v441 = vadd.f32 %v121, 1.0
  %v442 = vadd.f32 %v122, 1.0
  %v443 = vadd.f32 %v123, 1.0
  %v444 = vadd.f32 %v124, 1.0
  %v445 = vadd.f32 %v125, 1.0
  %v446 = vadd.f32 %v126, 1.0
  %v447 = vadd.f32 %v127, 1.0
  %v448 = vadd.f32 %v128, 1.0
  %v449 = vadd.f32 %v129, 1.0
  %v450 = vadd.f32 %v130, 1.0
  %v451 = vadd.f32 %v131, 1.0
  %v452 = vadd.f32 %v132, 1.0
  %v453 = vadd.f32 %v133, 1.0
  %v454 = vadd.f32 %v134, 1.0
  %v455 = vadd.f32 %v135, 1.0
  %v456 = vadd.f32 %v136, 1.0
  %v457 = vadd.f32 %v137, 1.0
  %v458 = vadd.f32 %v138, 1.0
  %v459 = vadd.f32 %v139, 1.0
  %v460 = vadd.f32 %v140, 1.0
  %v461 = vadd.f32 %v141, 1.0
  %v462 = vadd.f32 %v142, 1.0
  %v463 = vadd.f32 %v143, 1.0
  %v464 = vadd.f32 %v144, 1.0
  %v465 = vadd.f32 %v145, 1.0
  %v466 = vadd.f32 %v146, 1.0
  %v467 = vadd.f32 %v147, 1.0
  %v468 = vadd.f32 %v148, 1.0
  %v469 = vadd.f32 %v149, 1.0
  %v470 = vadd.f32 %v150, 1.0
  %v471 = vadd.f32 %v151, 1.0
  %v472 = vadd.f32 %v152, 1.0
  %v473 = vadd.f32 %v153, 1.0
  %v474 = vadd.f32 %v154, 1.0
  %v475 = vadd.f32 %v155, 1.0
  %v476 = vadd.f32 %v156, 1.0
  %v477 = vadd.f32 %v157, 1.0
  %v478 = vadd.f32 %v158, 1.0
  %v479 = vadd.f32 %v159, 1.0
  %v480 = vadd.f32 %v160, 1.0
  %v481 = vadd.f32 %v161, 1.0
  %v482 = vadd.f32 %v162, 1.0
  %v483 = vadd.f32 %v163, 1.0
  %v484 = vadd.f32 %v164, 1.0
  %v485 = vadd.f32 %v165, 1.0
  %v486 = vadd.f32 %v166, 1.0
  %v487 = vadd.f32 %v167, 1.0
  %v488 = vadd.f32 %v168, 1.0
  %v489 = vadd.f32 %v169, 1.0
  %v490 = vadd.f32 %v170, 1.0
  %v491 = vadd.f32 %v171, 1.0
  %v492 = vadd.f32 %v172, 1.0
  %v493 = vadd.f32 %v173, 1.0
  %v494 = vadd.f32 %v174, 1.0
  %v495 = vadd.f32 %v175, 1.0
  %v496 = vadd.f32 %v176, 1.0
  %v497 = vadd.f32 %v177, 1.0
  %v498 = vadd.f32 %v178, 1.0
  %v499 = vadd.f32 %v179, 1.0
  %v500 = vadd.f32 %v180, 1.0
  %v501 = vadd.f32 %v181, 1.0
  %v502 = vadd.f32 %v182, 1.0
  %v503 = vadd.f32 %v183, 1.0
  %v504 = vadd.f32 %v184, 1.0
  %v505 = vadd.f32 %v185, 1.0
  %v506 = vadd.f32 %v186, 1.0
  %v507 = vadd.f32 %v187, 1.0
  %v508 = vadd.f32 %v188, 1.0
  %v509 = vadd.f32 %v189, 1.0
  %v510 = vadd.f32 %v190, 1.0
  %v511 = vadd.f32 %v191, 1.0
  %v512 = vadd.f32 %v192, 1.0
  %v513 = vadd.f32 %v193, 1.0
  %v514 = vadd.f32 %v194, 1.0
  %v515 = vadd.f32 %v195, 1.0
  %v516 = vadd.f32 %v196, 1.0
  %v517 = vadd.f32 %v197, 1.0
  %v518 = vadd.f32 %v198, 1.0
  %v519 = vadd.f32 %v199, 1.0
  %v520 = vadd.f32 %v200, 1.0
  %v521 = vadd.f32 %v201, 1.0
  %v522 = vadd.f32 %v202, 1.0
  %v523 = vadd.f32 %v203, 1.0
  %v524 = vadd.f32 %v204, 1.0
  %v525 = vadd.f32 %v205, 1.0
  %v526 = vadd.f32 %v206, 1.0
  %v527 = vadd.f32 %v207, 1.0
  %v528 = vadd.f32 %v208, 1.0
  %v529 = vadd.f32 %v209, 1.0
  %v530 = vadd.f32 %v210, 1.0
  %v531 = vadd.f32 %v211, 1.0
  %v532 = vadd.f32 %v212, 1.0
  %v533 = vadd.f32 %v213, 1.0
  %v534 = vadd.f32 %v214, 1.0
  %v535 = vadd.f32 %v215, 1.0
  %v536 = vadd.f32 %v216, 1.0
  %v537 = vadd.f32 %v217, 1.0
  %v538 = vadd.f32 %v218, 1.0
  %v539 = vadd.f32 %v219, 1.0
  %v540 = vadd.f32 %v220, 1.0
  %v541 = vadd.f32 %v221, 1.0
  %v542 = vadd.f32 %v222, 1.0
  %v543 = vadd.f32 %v223, 1.0
  %v544 = vadd.f32 %v224, 1.0
  %v545 = vadd.f32 %v225, 1.0
  %v546 = vadd.f32 %v226, 1.0
  %v547 = vadd.f32 %v227, 1.0
  %v548 = vadd.f32 %v228, 1.0
  %v549 = vadd.f32 %v229, 1.0
  %v550 = vadd.f32 %v230, 1.0
  %v551 = vadd.f32 %v231, 1.0
  %v552 = vadd.f32 %v232, 1.0
  %v553 = vadd.f32 %v233, 1.0
  %v554 = vadd.f32 %v234, 1.0
  %v555 = vadd.f32 %v235, 1.0
  %v556 = vadd.f32 %v236, 1.0
  %v557 = vadd.f32 %v237, 1.0
  %v558 = vadd.f32 %v238, 1.0
  %v559 = vadd.f32 %v239, 1.0
  %v560 = vadd.f32 %v240, 1.0
  %v561 = vadd.f32 %v241, 1.0
  %v562 = vadd.f32 %v242, 1.0
  %v563 = vadd.f32 %v243, 1.0
  %v564 = vadd.f32 %v244, 1.0
  %v565 = vadd.f32 %v245, 1.0
  %v566 = vadd.f32 %v246, 1.0
  %v567 = vadd.f32 %v247, 1.0
  %v568 = vadd.f32 %v248, 1.0
  %v569 = vadd.f32 %v249, 1.0
  %v570 = vadd.f32 %v250, 1.0
  %v571 = vadd.f32 %v251, 1.0
  %v572 = vadd.f32 %v252, 1.0
  %v573 = vadd.f32 %v253, 1.0
  %v574 = vadd.f32 %v254, 1.0
  %v575 = vadd.f32 %v255, 1.0
  %v576 = vadd.f32 %v256, 1.0
  %v577 = vadd.f32 %v257, 1.0
  %v578 = vadd.f32 %v258, 1.0
  %v579 = vadd.f32 %v259, 1.0
  %v580 = vadd.f32 %v260, 1.0
  %v581 = vadd.f32 %v261, 1.0
  %v582 = vadd.f32 %v262, 1.0
  %v583 = vadd.f32 %v263, 1.0
  %v584 = vadd.f32 %v264, 1.0
  %v585 = vadd.f32 %v265, 1.0
  %v586 = vadd.f32 %v266, 1.0
  %v587 = vadd.f32 %v267, 1.0
  %v588 = vadd.f32 %v268, 1.0
  %v589 = vadd.f32 %v269, 1.0
  %v590 = vadd.f32 %v270, 1.0
  %v591 = vadd.f32 %v271, 1.0
  %v592 = vadd.f32 %v272, 1.0
  %v593 = vadd.f32 %v273, 1.0
  %v594 = vadd.f32 %v274, 1.0
  %v595 = vadd.f32 %v275, 1.0
  %v596 = vadd.f32 %v276, 1.0
  %v597 = vadd.f32 %v277, 1.0
  %v598 = vadd.f32 %v278, 1.0
  %v599 = vadd.f32 %v279, 1.0
  %v600 = vadd.f32 %v280, 1.0
  %v601 = vadd.f32 %v281, 1.0
  %v602 = vadd.f32 %v282, 1.0
  %v603 = vadd.f32 %v283, 1.0
  %v604 = vadd.f32 %v284, 1.0
  %v605 = vadd.f32 %v285, 1.0
  %v606 = vadd.f32 %v286, 1.0
  %v607 = vadd.f32 %v287, 1.0
  %v608 = vadd.f32 %v288, 1.0
  %v609 = vadd.f32 %v289, 1.0
  %v610 = vadd.f32 %v290, 1.0
  %v611 = vadd.f32 %v291, 1.0
  %v612 = vadd.f32 %v292, 1.0
  %v613 = vadd.f32 %v293, 1.0
  %v614 = vadd.f32 %v294, 1.0
  %v615 = vadd.f32 %v295, 1.0
  %v616 = vadd.f32 %v296, 1.0
  %v617 = vadd.f32 %v297, 1.0
  %v618 = vadd.f32 %v298, 1.0
  %v619 = vadd.f32 %v299, 1.0
  %v620 = vadd.f32 %v300, 1.0
  %v621 = vadd.f32 %v301, 1.0
  %v622 = vadd.f32 %v302, 1.0
  %v623 = vadd.f32 %v303, 1.0
  %v624 = vadd.f32 %v304, 1.0
  %v625 = vadd.f32 %v305, 1.0
  %v626 = vadd.f32 %v306, 1.0
  %v627 = vadd.f32 %v307, 1.0
  %v628 = vadd.f32 %v308, 1.0
  %v629 = vadd.f32 %v309, 1.0
  %v630 = vadd.f32 %v310, 1.0
  %v631 = vadd.f32 %v311, 1.0
  %v632 = vadd.f32 %v312, 1.0
  %v633 = vadd.f32 %v313, 1.0
  %v634 = vadd.f32 %v314, 1.0
  %v635 = vadd.f32 %v315, 1.0
  %v636 = vadd.f32 %v316, 1.0
  %v637 = vadd.f32 %v317, 1.0
  %v638 = vadd.f32 %v318, 1.0
  %v639 = vadd.f32 %v319, 1.0
  %v640 = vadd.f32 %v320, 1.0
  %v641 = vadd.f32 %v321, 1.0
  %v642 = vadd.f32 %v322, 1.0
  %v643 = vadd.f32 %v323, 1.0
  %v644 = vadd.f32 %v324, 1.0
  %v645 = vadd.f32 %v325, 1.0
  %v646 = vadd.f32 %v326, 1.0
  %v647 = vadd.f32 %v327, 1.0
  %648 = vst [vmem:[%s1] sm:$0xff] %v328
  %649 = vst [vmem:[%s1 + $0x8] sm:$0xff] %v329
  %650 = vst [vmem:[%s1 + $0x10] sm:$0xff] %v330
  %651 = vst [vmem:[%s1 + $0x18] sm:$0xff] %v331
  %vm652 = vcmask 64512
  %653 = vst.msk [vmem:[%s1 + $0x20] sm:$0xff] %vm652, %v332
  %654 = vst [vmem:[%s1 + $0x28] sm:$0xff] %v333
  %655 = vst [vmem:[%s1 + $0x30] sm:$0xff] %v334
  %656 = vst [vmem:[%s1 + $0x38] sm:$0xff] %v335
  %657 = vst [vmem:[%s1 + $0x40] sm:$0xff] %v336
  %658 = vst.msk [vmem:[%s1 + $0x48] sm:$0xff] %vm652, %v337
  %659 = vst [vmem:[%s1 + $0x50] sm:$0xff] %v338
  %660 = vst [vmem:[%s1 + $0x58] sm:$0xff] %v339
  %661 = vst [vmem:[%s1 + $0x60] sm:$0xff] %v340
  %662 = vst [vmem:[%s1 + $0x68] sm:$0xff] %v341
  %663 = vst.msk [vmem:[%s1 + $0x70] sm:$0xff] %vm652, %v342
  %664 = vst [vmem:[%s1 + $0x78] sm:$0xff] %v343
  %665 = vst [vmem:[%s1 + $0x80] sm:$0xff] %v344
  %666 = vst [vmem:[%s1 + $0x88] sm:$0xff] %v345
  %667 = vst [vmem:[%s1 + $0x90] sm:$0xff] %v346
  %668 = vst.msk [vmem:[%s1 + $0x98] sm:$0xff] %vm652, %v347
  %669 = vst [vmem:[%s1 + $0xa0] sm:$0xff] %v348
  %670 = vst [vmem:[%s1 + $0xa8] sm:$0xff] %v349
  %671 = vst [vmem:[%s1 + $0xb0] sm:$0xff] %v350
  %672 = vst [vmem:[%s1 + $0xb8] sm:$0xff] %v351
  %673 = vst.msk [vmem:[%s1 + $0xc0] sm:$0xff] %vm652, %v352
  %674 = vst [vmem:[%s1 + $0xc8] sm:$0xff] %v353
  %675 = vst [vmem:[%s1 + $0xd0] sm:$0xff] %v354
  %676 = vst [vmem:[%s1 + $0xd8] sm:$0xff] %v355
  %677 = vst [vmem:[%s1 + $0xe0] sm:$0xff] %v356
  %678 = vst.msk [vmem:[%s1 + $0xe8] sm:$0xff] %vm652, %v357
  %679 = vst [vmem:[%s1 + $0xf0] sm:$0xff] %v358
  %680 = vst [vmem:[%s1 + $0xf8] sm:$0xff] %v359
  %681 = vst [vmem:[%s1 + $0x100] sm:$0xff] %v360
  %682 = vst [vmem:[%s1 + $0x108] sm:$0xff] %v361
  %683 = vst.msk [vmem:[%s1 + $0x110] sm:$0xff] %vm652, %v362
  %684 = vst [vmem:[%s1 + $0x118] sm:$0xff] %v363
  %685 = vst [vmem:[%s1 + $0x120] sm:$0xff] %v364
  %686 = vst [vmem:[%s1 + $0x128] sm:$0xff] %v365
  %687 = vst [vmem:[%s1 + $0x130] sm:$0xff] %v366
  %688 = vst.msk [vmem:[%s1 + $0x138] sm:$0xff] %vm652, %v367
  %689 = vst [vmem:[%s1 + $0x140] sm:$0xff] %v368
  %690 = vst [vmem:[%s1 + $0x148] sm:$0xff] %v369
  %691 = vst [vmem:[%s1 + $0x150] sm:$0xff] %v370
  %692 = vst [vmem:[%s1 + $0x158] sm:$0xff] %v371
  %693 = vst.msk [vmem:[%s1 + $0x160] sm:$0xff] %vm652, %v372
  %694 = vst [vmem:[%s1 + $0x168] sm:$0xff] %v373
  %695 = vst [vmem:[%s1 + $0x170] sm:$0xff] %v374
  %696 = vst [vmem:[%s1 + $0x178] sm:$0xff] %v375
  %697 = vst [vmem:[%s1 + $0x180] sm:$0xff] %v376
  %698 = vst.msk [vmem:[%s1 + $0x188] sm:$0xff] %vm652, %v377
  %699 = vst [vmem:[%s1 + $0x190] sm:$0xff] %v378
  %700 = vst [vmem:[%s1 + $0x198] sm:$0xff] %v379
  %701 = vst [vmem:[%s1 + $0x1a0] sm:$0xff] %v380
  %702 = vst [vmem:[%s1 + $0x1a8] sm:$0xff] %v381
  %703 = vst.msk [vmem:[%s1 + $0x1b0] sm:$0xff] %vm652, %v382
  %704 = vst [vmem:[%s1 + $0x1b8] sm:$0xff] %v383
  %705 = vst [vmem:[%s1 + $0x1c0] sm:$0xff] %v384
  %706 = vst [vmem:[%s1 + $0x1c8] sm:$0xff] %v385
  %707 = vst [vmem:[%s1 + $0x1d0] sm:$0xff] %v386
  %708 = vst.msk [vmem:[%s1 + $0x1d8] sm:$0xff] %vm652, %v387
  %709 = vst [vmem:[%s1 + $0x1e0] sm:$0xff] %v388
  %710 = vst [vmem:[%s1 + $0x1e8] sm:$0xff] %v389
  %711 = vst [vmem:[%s1 + $0x1f0] sm:$0xff] %v390
  %712 = vst [vmem:[%s1 + $0x1f8] sm:$0xff] %v391
  %713 = vst.msk [vmem:[%s1 + $0x200] sm:$0xff] %vm652, %v392
  %714 = vst [vmem:[%s1 + $0x208] sm:$0xff] %v393
  %715 = vst [vmem:[%s1 + $0x210] sm:$0xff] %v394
  %716 = vst [vmem:[%s1 + $0x218] sm:$0xff] %v395
  %717 = vst [vmem:[%s1 + $0x220] sm:$0xff] %v396
  %718 = vst.msk [vmem:[%s1 + $0x228] sm:$0xff] %vm652, %v397
  %719 = vst [vmem:[%s1 + $0x230] sm:$0xff] %v398
  %720 = vst [vmem:[%s1 + $0x238] sm:$0xff] %v399
  %721 = vst [vmem:[%s1 + $0x240] sm:$0xff] %v400
  %722 = vst [vmem:[%s1 + $0x248] sm:$0xff] %v401
  %723 = vst.msk [vmem:[%s1 + $0x250] sm:$0xff] %vm652, %v402
  %724 = vst [vmem:[%s1 + $0x258] sm:$0xff] %v403
  %725 = vst [vmem:[%s1 + $0x260] sm:$0xff] %v404
  %726 = vst [vmem:[%s1 + $0x268] sm:$0xff] %v405
  %727 = vst [vmem:[%s1 + $0x270] sm:$0xff] %v406
  %728 = vst.msk [vmem:[%s1 + $0x278] sm:$0xff] %vm652, %v407
  %729 = vst [vmem:[%s1 + $0x280] sm:$0xff] %v408
  %730 = vst [vmem:[%s1 + $0x288] sm:$0xff] %v409
  %731 = vst [vmem:[%s1 + $0x290] sm:$0xff] %v410
  %732 = vst [vmem:[%s1 + $0x298] sm:$0xff] %v411
  %733 = vst.msk [vmem:[%s1 + $0x2a0] sm:$0xff] %vm652, %v412
  %734 = vst [vmem:[%s1 + $0x2a8] sm:$0xff] %v413
  %735 = vst [vmem:[%s1 + $0x2b0] sm:$0xff] %v414
  %736 = vst [vmem:[%s1 + $0x2b8] sm:$0xff] %v415
  %737 = vst [vmem:[%s1 + $0x2c0] sm:$0xff] %v416
  %738 = vst.msk [vmem:[%s1 + $0x2c8] sm:$0xff] %vm652, %v417
  %739 = vst [vmem:[%s1 + $0x2d0] sm:$0xff] %v418
  %740 = vst [vmem:[%s1 + $0x2d8] sm:$0xff] %v419
  %741 = vst [vmem:[%s1 + $0x2e0] sm:$0xff] %v420
  %742 = vst [vmem:[%s1 + $0x2e8] sm:$0xff] %v421
  %743 = vst.msk [vmem:[%s1 + $0x2f0] sm:$0xff] %vm652, %v422
  %744 = vst [vmem:[%s1 + $0x2f8] sm:$0xff] %v423
  %745 = vst [vmem:[%s1 + $0x300] sm:$0xff] %v424
  %746 = vst [vmem:[%s1 + $0x308] sm:$0xff] %v425
  %747 = vst [vmem:[%s1 + $0x310] sm:$0xff] %v426
  %748 = vst.msk [vmem:[%s1 + $0x318] sm:$0xff] %vm652, %v427
  %749 = vst [vmem:[%s1 + $0x320] sm:$0xff] %v428
  %750 = vst [vmem:[%s1 + $0x328] sm:$0xff] %v429
  %751 = vst [vmem:[%s1 + $0x330] sm:$0xff] %v430
  %752 = vst [vmem:[%s1 + $0x338] sm:$0xff] %v431
  %753 = vst.msk [vmem:[%s1 + $0x340] sm:$0xff] %vm652, %v432
  %754 = vst [vmem:[%s1 + $0x348] sm:$0xff] %v433
  %755 = vst [vmem:[%s1 + $0x350] sm:$0xff] %v434
  %756 = vst [vmem:[%s1 + $0x358] sm:$0xff] %v435
  %757 = vst [vmem:[%s1 + $0x360] sm:$0xff] %v436
  %758 = vst.msk [vmem:[%s1 + $0x368] sm:$0xff] %vm652, %v437
  %759 = vst [vmem:[%s1 + $0x370] sm:$0xff] %v438
  %760 = vst [vmem:[%s1 + $0x378] sm:$0xff] %v439
  %761 = vst [vmem:[%s1 + $0x380] sm:$0xff] %v440
  %762 = vst [vmem:[%s1 + $0x388] sm:$0xff] %v441
  %763 = vst.msk [vmem:[%s1 + $0x390] sm:$0xff] %vm652, %v442
  %764 = vst [vmem:[%s1 + $0x398] sm:$0xff] %v443
  %765 = vst [vmem:[%s1 + $0x3a0] sm:$0xff] %v444
  %766 = vst [vmem:[%s1 + $0x3a8] sm:$0xff] %v445
  %767 = vst [vmem:[%s1 + $0x3b0] sm:$0xff] %v446
  %768 = vst.msk [vmem:[%s1 + $0x3b8] sm:$0xff] %vm652, %v447
  %769 = vst [vmem:[%s1 + $0x3c0] sm:$0xff] %v448
  %770 = vst [vmem:[%s1 + $0x3c8] sm:$0xff] %v449
  %771 = vst [vmem:[%s1 + $0x3d0] sm:$0xff] %v450
  %772 = vst [vmem:[%s1 + $0x3d8] sm:$0xff] %v451
  %773 = vst.msk [vmem:[%s1 + $0x3e0] sm:$0xff] %vm652, %v452
  %774 = vst [vmem:[%s1 + $0x3e8] sm:$0xff] %v453
  %775 = vst [vmem:[%s1 + $0x3f0] sm:$0xff] %v454
  %776 = vst [vmem:[%s1 + $0x3f8] sm:$0xff] %v455
  %777 = vst [vmem:[%s1 + $0x400] sm:$0xff] %v456
  %778 = vst.msk [vmem:[%s1 + $0x408] sm:$0xff] %vm652, %v457
  %779 = vst [vmem:[%s1 + $0x410] sm:$0xff] %v458
  %780 = vst [vmem:[%s1 + $0x418] sm:$0xff] %v459
  %781 = vst [vmem:[%s1 + $0x420] sm:$0xff] %v460
  %782 = vst [vmem:[%s1 + $0x428] sm:$0xff] %v461
  %783 = vst.msk [vmem:[%s1 + $0x430] sm:$0xff] %vm652, %v462
  %784 = vst [vmem:[%s1 + $0x438] sm:$0xff] %v463
  %785 = vst [vmem:[%s1 + $0x440] sm:$0xff] %v464
  %786 = vst [vmem:[%s1 + $0x448] sm:$0xff] %v465
  %787 = vst [vmem:[%s1 + $0x450] sm:$0xff] %v466
  %788 = vst.msk [vmem:[%s1 + $0x458] sm:$0xff] %vm652, %v467
  %789 = vst [vmem:[%s1 + $0x460] sm:$0xff] %v468
  %790 = vst [vmem:[%s1 + $0x468] sm:$0xff] %v469
  %791 = vst [vmem:[%s1 + $0x470] sm:$0xff] %v470
  %792 = vst [vmem:[%s1 + $0x478] sm:$0xff] %v471
  %793 = vst.msk [vmem:[%s1 + $0x480] sm:$0xff] %vm652, %v472
  %794 = vst [vmem:[%s1 + $0x488] sm:$0xff] %v473
  %795 = vst [vmem:[%s1 + $0x490] sm:$0xff] %v474
  %796 = vst [vmem:[%s1 + $0x498] sm:$0xff] %v475
  %797 = vst [vmem:[%s1 + $0x4a0] sm:$0xff] %v476
  %798 = vst.msk [vmem:[%s1 + $0x4a8] sm:$0xff] %vm652, %v477
  %799 = vst [vmem:[%s1 + $0x4b0] sm:$0xff] %v478
  %800 = vst [vmem:[%s1 + $0x4b8] sm:$0xff] %v479
  %801 = vst [vmem:[%s1 + $0x4c0] sm:$0xff] %v480
  %802 = vst [vmem:[%s1 + $0x4c8] sm:$0xff] %v481
  %803 = vst.msk [vmem:[%s1 + $0x4d0] sm:$0xff] %vm652, %v482
  %804 = vst [vmem:[%s1 + $0x4d8] sm:$0xff] %v483
  %805 = vst [vmem:[%s1 + $0x4e0] sm:$0xff] %v484
  %806 = vst [vmem:[%s1 + $0x4e8] sm:$0xff] %v485
  %807 = vst [vmem:[%s1 + $0x4f0] sm:$0xff] %v486
  %808 = vst.msk [vmem:[%s1 + $0x4f8] sm:$0xff] %vm652, %v487
  %809 = vst [vmem:[%s1 + $0x500] sm:$0xff] %v488
  %810 = vst [vmem:[%s1 + $0x508] sm:$0xff] %v489
  %811 = vst [vmem:[%s1 + $0x510] sm:$0xff] %v490
  %812 = vst [vmem:[%s1 + $0x518] sm:$0xff] %v491
  %813 = vst.msk [vmem:[%s1 + $0x520] sm:$0xff] %vm652, %v492
  %814 = vst [vmem:[%s1 + $0x528] sm:$0xff] %v493
  %815 = vst [vmem:[%s1 + $0x530] sm:$0xff] %v494
  %816 = vst [vmem:[%s1 + $0x538] sm:$0xff] %v495
  %817 = vst [vmem:[%s1 + $0x540] sm:$0xff] %v496
  %818 = vst.msk [vmem:[%s1 + $0x548] sm:$0xff] %vm652, %v497
  %819 = vst [vmem:[%s1 + $0x550] sm:$0xff] %v498
  %820 = vst [vmem:[%s1 + $0x558] sm:$0xff] %v499
  %821 = vst [vmem:[%s1 + $0x560] sm:$0xff] %v500
  %822 = vst [vmem:[%s1 + $0x568] sm:$0xff] %v501
  %823 = vst.msk [vmem:[%s1 + $0x570] sm:$0xff] %vm652, %v502
  %824 = vst [vmem:[%s1 + $0x578] sm:$0xff] %v503
  %825 = vst [vmem:[%s1 + $0x580] sm:$0xff] %v504
  %826 = vst [vmem:[%s1 + $0x588] sm:$0xff] %v505
  %827 = vst [vmem:[%s1 + $0x590] sm:$0xff] %v506
  %828 = vst.msk [vmem:[%s1 + $0x598] sm:$0xff] %vm652, %v507
  %829 = vst [vmem:[%s1 + $0x5a0] sm:$0xff] %v508
  %830 = vst [vmem:[%s1 + $0x5a8] sm:$0xff] %v509
  %831 = vst [vmem:[%s1 + $0x5b0] sm:$0xff] %v510
  %832 = vst [vmem:[%s1 + $0x5b8] sm:$0xff] %v511
  %833 = vst.msk [vmem:[%s1 + $0x5c0] sm:$0xff] %vm652, %v512
  %834 = vst [vmem:[%s1 + $0x5c8] sm:$0xff] %v513
  %835 = vst [vmem:[%s1 + $0x5d0] sm:$0xff] %v514
  %836 = vst [vmem:[%s1 + $0x5d8] sm:$0xff] %v515
  %837 = vst [vmem:[%s1 + $0x5e0] sm:$0xff] %v516
  %838 = vst.msk [vmem:[%s1 + $0x5e8] sm:$0xff] %vm652, %v517
  %839 = vst [vmem:[%s1 + $0x5f0] sm:$0xff] %v518
  %840 = vst [vmem:[%s1 + $0x5f8] sm:$0xff] %v519
  %841 = vst [vmem:[%s1 + $0x600] sm:$0xff] %v520
  %842 = vst [vmem:[%s1 + $0x608] sm:$0xff] %v521
  %843 = vst.msk [vmem:[%s1 + $0x610] sm:$0xff] %vm652, %v522
  %844 = vst [vmem:[%s1 + $0x618] sm:$0xff] %v523
  %845 = vst [vmem:[%s1 + $0x620] sm:$0xff] %v524
  %846 = vst [vmem:[%s1 + $0x628] sm:$0xff] %v525
  %847 = vst [vmem:[%s1 + $0x630] sm:$0xff] %v526
  %848 = vst.msk [vmem:[%s1 + $0x638] sm:$0xff] %vm652, %v527
  %849 = vst [vmem:[%s1 + $0x640] sm:$0xff] %v528
  %850 = vst [vmem:[%s1 + $0x648] sm:$0xff] %v529
  %851 = vst [vmem:[%s1 + $0x650] sm:$0xff] %v530
  %852 = vst [vmem:[%s1 + $0x658] sm:$0xff] %v531
  %853 = vst.msk [vmem:[%s1 + $0x660] sm:$0xff] %vm652, %v532
  %854 = vst [vmem:[%s1 + $0x668] sm:$0xff] %v533
  %855 = vst [vmem:[%s1 + $0x670] sm:$0xff] %v534
  %856 = vst [vmem:[%s1 + $0x678] sm:$0xff] %v535
  %857 = vst [vmem:[%s1 + $0x680] sm:$0xff] %v536
  %858 = vst.msk [vmem:[%s1 + $0x688] sm:$0xff] %vm652, %v537
  %859 = vst [vmem:[%s1 + $0x690] sm:$0xff] %v538
  %860 = vst [vmem:[%s1 + $0x698] sm:$0xff] %v539
  %861 = vst [vmem:[%s1 + $0x6a0] sm:$0xff] %v540
  %862 = vst [vmem:[%s1 + $0x6a8] sm:$0xff] %v541
  %863 = vst.msk [vmem:[%s1 + $0x6b0] sm:$0xff] %vm652, %v542
  %864 = vst [vmem:[%s1 + $0x6b8] sm:$0xff] %v543
  %865 = vst [vmem:[%s1 + $0x6c0] sm:$0xff] %v544
  %866 = vst [vmem:[%s1 + $0x6c8] sm:$0xff] %v545
  %867 = vst [vmem:[%s1 + $0x6d0] sm:$0xff] %v546
  %868 = vst.msk [vmem:[%s1 + $0x6d8] sm:$0xff] %vm652, %v547
  %869 = vst [vmem:[%s1 + $0x6e0] sm:$0xff] %v548
  %870 = vst [vmem:[%s1 + $0x6e8] sm:$0xff] %v549
  %871 = vst [vmem:[%s1 + $0x6f0] sm:$0xff] %v550
  %872 = vst [vmem:[%s1 + $0x6f8] sm:$0xff] %v551
  %873 = vst.msk [vmem:[%s1 + $0x700] sm:$0xff] %vm652, %v552
  %874 = vst [vmem:[%s1 + $0x708] sm:$0xff] %v553
  %875 = vst [vmem:[%s1 + $0x710] sm:$0xff] %v554
  %876 = vst [vmem:[%s1 + $0x718] sm:$0xff] %v555
  %877 = vst [vmem:[%s1 + $0x720] sm:$0xff] %v556
  %878 = vst.msk [vmem:[%s1 + $0x728] sm:$0xff] %vm652, %v557
  %879 = vst [vmem:[%s1 + $0x730] sm:$0xff] %v558
  %880 = vst [vmem:[%s1 + $0x738] sm:$0xff] %v559
  %881 = vst [vmem:[%s1 + $0x740] sm:$0xff] %v560
  %882 = vst [vmem:[%s1 + $0x748] sm:$0xff] %v561
  %883 = vst.msk [vmem:[%s1 + $0x750] sm:$0xff] %vm652, %v562
  %884 = vst [vmem:[%s1 + $0x758] sm:$0xff] %v563
  %885 = vst [vmem:[%s1 + $0x760] sm:$0xff] %v564
  %886 = vst [vmem:[%s1 + $0x768] sm:$0xff] %v565
  %887 = vst [vmem:[%s1 + $0x770] sm:$0xff] %v566
  %888 = vst.msk [vmem:[%s1 + $0x778] sm:$0xff] %vm652, %v567
  %889 = vst [vmem:[%s1 + $0x780] sm:$0xff] %v568
  %890 = vst [vmem:[%s1 + $0x788] sm:$0xff] %v569
  %891 = vst [vmem:[%s1 + $0x790] sm:$0xff] %v570
  %892 = vst [vmem:[%s1 + $0x798] sm:$0xff] %v571
  %893 = vst.msk [vmem:[%s1 + $0x7a0] sm:$0xff] %vm652, %v572
  %894 = vst [vmem:[%s1 + $0x7a8] sm:$0xff] %v573
  %895 = vst [vmem:[%s1 + $0x7b0] sm:$0xff] %v574
  %896 = vst [vmem:[%s1 + $0x7b8] sm:$0xff] %v575
  %897 = vst [vmem:[%s1 + $0x7c0] sm:$0xff] %v576
  %898 = vst.msk [vmem:[%s1 + $0x7c8] sm:$0xff] %vm652, %v577
  %899 = vst [vmem:[%s1 + $0x7d0] sm:$0xff] %v578
  %900 = vst [vmem:[%s1 + $0x7d8] sm:$0xff] %v579
  %901 = vst [vmem:[%s1 + $0x7e0] sm:$0xff] %v580
  %902 = vst [vmem:[%s1 + $0x7e8] sm:$0xff] %v581
  %903 = vst.msk [vmem:[%s1 + $0x7f0] sm:$0xff] %vm652, %v582
  %904 = vst [vmem:[%s1 + $0x7f8] sm:$0xff] %v583
  %905 = vst [vmem:[%s1 + $0x800] sm:$0xff] %v584
  %906 = vst [vmem:[%s1 + $0x808] sm:$0xff] %v585
  %907 = vst [vmem:[%s1 + $0x810] sm:$0xff] %v586
  %908 = vst.msk [vmem:[%s1 + $0x818] sm:$0xff] %vm652, %v587
  %909 = vst [vmem:[%s1 + $0x820] sm:$0xff] %v588
  %910 = vst [vmem:[%s1 + $0x828] sm:$0xff] %v589
  %911 = vst [vmem:[%s1 + $0x830] sm:$0xff] %v590
  %912 = vst [vmem:[%s1 + $0x838] sm:$0xff] %v591
  %913 = vst.msk [vmem:[%s1 + $0x840] sm:$0xff] %vm652, %v592
  %914 = vst [vmem:[%s1 + $0x848] sm:$0xff] %v593
  %915 = vst [vmem:[%s1 + $0x850] sm:$0xff] %v594
  %916 = vst [vmem:[%s1 + $0x858] sm:$0xff] %v595
  %917 = vst [vmem:[%s1 + $0x860] sm:$0xff] %v596
  %918 = vst.msk [vmem:[%s1 + $0x868] sm:$0xff] %vm652, %v597
  %919 = vst [vmem:[%s1 + $0x870] sm:$0xff] %v598
  %920 = vst [vmem:[%s1 + $0x878] sm:$0xff] %v599
  %921 = vst [vmem:[%s1 + $0x880] sm:$0xff] %v600
  %922 = vst [vmem:[%s1 + $0x888] sm:$0xff] %v601
  %923 = vst.msk [vmem:[%s1 + $0x890] sm:$0xff] %vm652, %v602
  %924 = vst [vmem:[%s1 + $0x898] sm:$0xff] %v603
  %925 = vst [vmem:[%s1 + $0x8a0] sm:$0xff] %v604
  %926 = vst [vmem:[%s1 + $0x8a8] sm:$0xff] %v605
  %927 = vst [vmem:[%s1 + $0x8b0] sm:$0xff] %v606
  %928 = vst.msk [vmem:[%s1 + $0x8b8] sm:$0xff] %vm652, %v607
  %929 = vst [vmem:[%s1 + $0x8c0] sm:$0xff] %v608
  %930 = vst [vmem:[%s1 + $0x8c8] sm:$0xff] %v609
  %931 = vst [vmem:[%s1 + $0x8d0] sm:$0xff] %v610
  %932 = vst [vmem:[%s1 + $0x8d8] sm:$0xff] %v611
  %933 = vst.msk [vmem:[%s1 + $0x8e0] sm:$0xff] %vm652, %v612
  %934 = vst [vmem:[%s1 + $0x8e8] sm:$0xff] %v613
  %935 = vst [vmem:[%s1 + $0x8f0] sm:$0xff] %v614
  %936 = vst [vmem:[%s1 + $0x8f8] sm:$0xff] %v615
  %937 = vst [vmem:[%s1 + $0x900] sm:$0xff] %v616
  %938 = vst.msk [vmem:[%s1 + $0x908] sm:$0xff] %vm652, %v617
  %939 = vst [vmem:[%s1 + $0x910] sm:$0xff] %v618
  %940 = vst [vmem:[%s1 + $0x918] sm:$0xff] %v619
  %941 = vst [vmem:[%s1 + $0x920] sm:$0xff] %v620
  %942 = vst [vmem:[%s1 + $0x928] sm:$0xff] %v621
  %943 = vst.msk [vmem:[%s1 + $0x930] sm:$0xff] %vm652, %v622
  %944 = vst [vmem:[%s1 + $0x938] sm:$0xff] %v623
  %945 = vst [vmem:[%s1 + $0x940] sm:$0xff] %v624
  %946 = vst [vmem:[%s1 + $0x948] sm:$0xff] %v625
  %947 = vst [vmem:[%s1 + $0x950] sm:$0xff] %v626
  %948 = vst.msk [vmem:[%s1 + $0x958] sm:$0xff] %vm652, %v627
  %949 = vst [vmem:[%s1 + $0x960] sm:$0xff] %v628
  %950 = vst [vmem:[%s1 + $0x968] sm:$0xff] %v629
  %951 = vst [vmem:[%s1 + $0x970] sm:$0xff] %v630
  %952 = vst [vmem:[%s1 + $0x978] sm:$0xff] %v631
  %953 = vst.msk [vmem:[%s1 + $0x980] sm:$0xff] %vm652, %v632
  %954 = vst [vmem:[%s1 + $0x988] sm:$0xff] %v633
  %955 = vst [vmem:[%s1 + $0x990] sm:$0xff] %v634
  %956 = vst [vmem:[%s1 + $0x998] sm:$0xff] %v635
  %957 = vst [vmem:[%s1 + $0x9a0] sm:$0xff] %v636
  %958 = vst.msk [vmem:[%s1 + $0x9a8] sm:$0xff] %vm652, %v637
  %959 = vst [vmem:[%s1 + $0x9b0] sm:$0xff] %v638
  %960 = vst [vmem:[%s1 + $0x9b8] sm:$0xff] %v639
  %961 = vst [vmem:[%s1 + $0x9c0] sm:$0xff] %v640
  %962 = vst [vmem:[%s1 + $0x9c8] sm:$0xff] %v641
  %963 = vst.msk [vmem:[%s1 + $0x9d0] sm:$0xff] %vm652, %v642
  %964 = vst [vmem:[%s1 + $0x9d8] sm:$0xff] %v643
  %965 = vst [vmem:[%s1 + $0x9e0] sm:$0xff] %v644
  %966 = vst [vmem:[%s1 + $0x9e8] sm:$0xff] %v645
  %967 = vst [vmem:[%s1 + $0x9f0] sm:$0xff] %v646
  %968 = vst.msk [vmem:[%s1 + $0x9f8] sm:$0xff] %vm652, %v647
  // Predicated region
  $region6: #{tpu_custom_call.1} parent=0 // pred_check
    _
  $region7: #{tpu_custom_call.1} parent=0 // pred_check_branch
    %970 = sbr.rel (0) target = $region9
  $region8: #{tpu_custom_call.1} parent=0 // pred_region
    _
  $region9: #{tpu_custom_call.1} parent=0 // pred_fallthru
    _
  // Predicated region
  $region10: #{tpu_custom_call.1} parent=0 // pred_check
    _
  $region11: #{tpu_custom_call.1} parent=0 // pred_check_branch
    %972 = sbr.rel (0) target = $region13
  $region12: #{tpu_custom_call.1} parent=0 // pred_region
    _
  $region13: #{tpu_custom_call.1} parent=0 // pred_fallthru
    _

</llo_original>
